<compile_context>
chip_gen: v7x
topology: tpu7x:2x2x1
jax: 0.10.0
libtpu: 0.0.40
codegen_flags: <defaults>
</compile_context>

<pallas_src>
import functools

import jax
import jax.numpy as jnp
from jax import lax
from jax.experimental import pallas as pl
from jax.experimental.pallas import tpu as pltpu


def _round_up(x, m):
    return ((x + m - 1) // m) * m


def _pick_tile(b):
    """Returns (tq, b_pad). b_pad is a multiple of tq; inputs are zero-padded."""
    if b <= 256:
        b_pad = _round_up(max(b, 8), 8)
        return b_pad, b_pad
    tq = 256
    if b >= 2048:
        # Larger query tiles only on chips with plenty of VMEM (v5e/v6e: 128 MiB).
        try:
            if int(pltpu.get_tpu_info().vmem_capacity_bytes) >= (100 << 20):
                tq = 512
        except Exception:
            pass
    return tq, _round_up(b, tq)


def _init_chunk(b_pad):
    """Chunk size for the one-time zjs HBM->VMEM streaming normalize."""
    if b_pad <= 512:
        return b_pad
    if b_pad <= 4096:
        return 256            # b_pad is a multiple of 256 here
    return b_pad // 16        # keeps the static unroll at 16 chunks


def _vmem_limit_bytes(b_pad, d, tq, init_chunk):
    d_pad = _round_up(d, 128)
    b_lane = _round_up(b_pad, 128)
    est = (b_pad * d_pad * 2                 # resident bf16 zjs copy
           + 2 * (2 * tq * d_pad * 4)        # zis + zjs tiles, double-buffered f32
           + init_chunk * d_pad * 4          # run_scoped init staging
           + 2 * 8 * b_lane * 4              # (1, b) col accumulators (sublane pad)
           + 5 * tq * b_lane * 4)            # logits / e / mask temporaries headroom
    est = int(est * 1.25) + (2 << 20)
    try:
        cap = int(pltpu.get_tpu_info().vmem_capacity_bytes) - (8 << 20)
    except Exception:
        cap = 56 << 20                       # safe on every generation (v7x = 64 MiB)
    return int(max(24 << 20, min(est, cap)))


def _ntxent_kernel(zis_ref, zjs_hbm_ref, zjs_tile_ref, out_ref,
                   zjs_bf16_ref, col_max_ref, col_sum_ref, acc_ref,
                   *, temperature, alpha, tq, batch, b_pad, d, init_chunk):
    q = pl.program_id(0)
    eps_sq = jnp.float32(1e-24)                 # (1e-12)^2 -- F.normalize clamp
    inv_t = jnp.float32(1.0 / temperature)
    padded = (b_pad != batch)                   # static Python bool
    safe_rank1 = (1.0 / temperature) <= 60.0    # static: rank-1 exp trick is safe

    # ---- one-time init: accumulators + stream/normalize zjs -> bf16 --------
    @pl.when(q == 0)
    def _init():
        col_max_ref[...] = jnp.full(col_max_ref.shape, -jnp.inf, jnp.float32)
        col_sum_ref[...] = jnp.zeros(col_sum_ref.shape, jnp.float32)
        acc_ref[0] = jnp.float32(0.0)
        acc_ref[1] = jnp.float32(0.0)

        def stream_normalize(stage_ref):
            for c in range(b_pad // init_chunk):         # static unroll (<= 16)
                off = c * init_chunk
                pltpu.sync_copy(zjs_hbm_ref.at[pl.ds(off, init_chunk), :],
                                stage_ref)
                z = stage_ref[...].astype(jnp.float32)
                inv_n = lax.rsqrt(jnp.maximum(
                    jnp.sum(z * z, axis=1, keepdims=True), eps_sq))
                zjs_bf16_ref[pl.ds(off, init_chunk), :] = (
                    z * inv_n).astype(jnp.bfloat16)

        pl.run_scoped(stream_normalize,
                      pltpu.VMEM((init_chunk, d), jnp.float32))

    # ---- normalize this zis row tile in f32; fold 1/temperature in ---------
    zis = zis_ref[...].astype(jnp.float32)
    inv_ni = lax.rsqrt(jnp.maximum(
        jnp.sum(zis * zis, axis=1, keepdims=True), eps_sq))
    zis_n = zis * (inv_ni * inv_t)                         # (tq, d), includes 1/T
    zis_bf16 = zis_n.astype(jnp.bfloat16)

    # ---- exact f32 diagonal (positive pairs) from the matching zjs rows ----
    zjt = zjs_tile_ref[...].astype(jnp.float32)
    inv_nj = lax.rsqrt(jnp.maximum(
        jnp.sum(zjt * zjt, axis=1, keepdims=True), eps_sq))
    diag = jnp.sum(zis_n * (zjt * inv_nj), axis=1, keepdims=True)   # (tq, 1)

    # ---- single bf16 MXU pass: (tq, b_pad) slab of logits_ab ---------------
    logits = lax.dot_general(zis_bf16, zjs_bf16_ref[...],
                             (((1,), (1,)), ((), ())),
                             preferred_element_type=jnp.float32)

    if padded:
        col_valid = lax.broadcasted_iota(jnp.int32, (1, b_pad), 1) < batch
        row_valid = (q * tq + lax.broadcasted_iota(jnp.int32, (tq, 1), 0)
                     < batch).astype(jnp.float32)

    # ---- row-wise LSE (direction a) -----------------------------------------
    row_max = jnp.max(logits, axis=1, keepdims=True)       # (tq, 1)
    e = jnp.exp(logits - row_max)                          # (tq, b_pad)
    e_row = jnp.where(col_valid, e, 0.0) if padded else e
    row_lse = row_max + jnp.log(jnp.sum(e_row, axis=1, keepdims=True))
    if padded:
        acc_ref[0] += jnp.sum((row_lse - diag) * row_valid)
        acc_ref[1] += jnp.sum(diag * row_valid)
    else:
        acc_ref[0] += jnp.sum(row_lse - diag)
        acc_ref[1] += jnp.sum(diag)

    # ---- online column-wise LSE (direction b) -------------------------------
    old_max = col_max_ref[...]                                        # (1, b_pad)
    new_max = jnp.maximum(old_max, jnp.max(logits, axis=0, keepdims=True))
    if safe_rank1:
        # exp(logits - new_max) == e * exp(row_max) * exp(-new_max); reuse e and
        # factor the correction so only a (tq,1) and a (1,b) scaling remain.
        rvm = jnp.exp(row_max)                                        # (tq, 1)
        if padded:
            rvm = rvm * row_valid
        contrib = jnp.exp(-new_max) * jnp.sum(e * rvm, axis=0, keepdims=True)
    else:
        # Tiny temperatures: exp(row_max) / exp(-new_max) could overflow f32;
        # recompute a fully-shifted exp instead (extra tq*b exps, still exact).
        e2 = jnp.exp(logits - new_max)
        if padded:
            e2 = e2 * row_valid
        contrib = jnp.sum(e2, axis=0, keepdims=True)
    col_sum_ref[...] = col_sum_ref[...] * jnp.exp(old_max - new_max) + contrib
    col_max_ref[...] = new_max

    # ---- finalize ------------------------------------------------------------
    @pl.when(q == pl.num_programs(0) - 1)
    def _finalize():
        col_lse = col_max_ref[...] + jnp.log(col_sum_ref[...])       # (1, b_pad)
        if padded:
            col_lse_sum = jnp.sum(jnp.where(col_valid, col_lse, 0.0))
        else:
            col_lse_sum = jnp.sum(col_lse)
        b_f = jnp.float32(batch)
        loss_a = acc_ref[0] / b_f
        loss_b = (col_lse_sum - acc_ref[1]) / b_f
        out_ref[0, 0] = (jnp.float32(alpha) * loss_a
                         + jnp.float32(1.0 - alpha) * loss_b)


def ntxent_loss(zis, zjs, *, temperature=0.5, alpha_weight=0.75):
    assert zis.ndim == 2 and zis.shape == zjs.shape
    b, d = zis.shape
    zis = zis.astype(jnp.float32)
    zjs = zjs.astype(jnp.float32)

    tq, b_pad = _pick_tile(b)
    if b_pad != b:
        zis = jnp.pad(zis, ((0, b_pad - b), (0, 0)))
        zjs = jnp.pad(zjs, ((0, b_pad - b), (0, 0)))
    init_chunk = _init_chunk(b_pad)
    grid = (b_pad // tq,)

    kernel = functools.partial(
        _ntxent_kernel, temperature=float(temperature),
        alpha=float(alpha_weight), tq=tq, batch=b, b_pad=b_pad, d=d,
        init_chunk=init_chunk)

    out = pl.pallas_call(
        kernel,
        out_shape=jax.ShapeDtypeStruct((1, 1), jnp.float32),
        grid_spec=pltpu.PrefetchScalarGridSpec(
            num_scalar_prefetch=0,
            grid=grid,
            in_specs=[
                pl.BlockSpec((tq, d), lambda q: (q, 0)),   # zis row tiles
                pl.BlockSpec(memory_space=pl.ANY),         # zjs raw HBM (init DMA)
                pl.BlockSpec((tq, d), lambda q: (q, 0)),   # matching zjs rows (diag)
            ],
            out_specs=pl.BlockSpec((1, 1), lambda q: (0, 0),
                                   memory_space=pltpu.MemorySpace.SMEM),
            scratch_shapes=[
                pltpu.VMEM((b_pad, d), jnp.bfloat16),   # normalized zjs (MXU RHS)
                pltpu.VMEM((1, b_pad), jnp.float32),    # running column max
                pltpu.VMEM((1, b_pad), jnp.float32),    # running column exp-sum
                pltpu.SMEM((2,), jnp.float32),          # [sum(lse - diag), sum(diag)]
            ]),
        compiler_params=pltpu.CompilerParams(
            dimension_semantics=("arbitrary",),
            vmem_limit_bytes=_vmem_limit_bytes(b_pad, d, tq, init_chunk)),
    )(zis, zjs, zjs)
    return out[0, 0]


def _reference(zis, zjs, temperature, alpha):
    zis = zis.astype(jnp.float32)
    zjs = zjs.astype(jnp.float32)
    zis_n = zis / jnp.maximum(jnp.linalg.norm(zis, axis=1, keepdims=True), 1e-12)
    zjs_n = zjs / jnp.maximum(jnp.linalg.norm(zjs, axis=1, keepdims=True), 1e-12)
    logits_ab = zis_n @ zjs_n.T / temperature
    logits_ba = zjs_n @ zis_n.T / temperature
    B = zis.shape[0]
    labels = jnp.eye(B, dtype=jnp.float32)

    def sxe(logits):
        lp = jax.nn.log_softmax(logits, axis=1)
        return -(labels * lp).sum() / B

    return alpha * sxe(logits_ab) + (1.0 - alpha) * sxe(logits_ba)


if __name__ == "__main__":
    key = jax.random.PRNGKey(0)
    k1, k2, k3, k4 = jax.random.split(key, 4)
    temperature, alpha = 0.5, 0.75

    # Case 1: B=8, D=32 — single tile, no padding.
    B1, D1 = 8, 32
    zis1 = jax.random.normal(k1, (B1, D1), dtype=jnp.float32)
    zjs1 = jax.random.normal(k2, (B1, D1), dtype=jnp.float32)
    loss1 = jax.block_until_ready(
        ntxent_loss(zis1, zjs1, temperature=temperature, alpha_weight=alpha))
    ref1 = _reference(zis1, zjs1, temperature, alpha)
    assert jnp.allclose(loss1, ref1, rtol=3e-2, atol=3e-2), (loss1, ref1)

    # Case 2: B=12, D=40 — exercises the zero-padding + masking path.
    B2, D2 = 12, 40
    zis2 = jax.random.normal(k3, (B2, D2), dtype=jnp.float32)
    zjs2 = jax.random.normal(k4, (B2, D2), dtype=jnp.float32)
    loss2 = jax.block_until_ready(
        ntxent_loss(zis2, zjs2, temperature=temperature, alpha_weight=alpha))
    ref2 = _reference(zis2, zjs2, temperature, alpha)
    assert jnp.allclose(loss2, ref2, rtol=3e-2, atol=3e-2), (loss2, ref2)

    print("KERNEL_OK")
</pallas_src>

<mosaic_0001>
module attributes {stable_mosaic.version = 11 : i64} {
  func.func @_ntxent_kernel(%arg0: i32, %arg1: memref<8x32xf32, #tpu.memory_space<vmem>>, %arg2: memref<8x32xf32, #tpu.memory_space<any>>, %arg3: memref<8x32xf32, #tpu.memory_space<vmem>>, %arg4: memref<1x1xf32, #tpu.memory_space<smem>>, %arg5: memref<8x32xbf16, #tpu.memory_space<vmem>>, %arg6: memref<1x8xf32, #tpu.memory_space<vmem>>, %arg7: memref<1x8xf32, #tpu.memory_space<vmem>>, %arg8: memref<2xf32, #tpu.memory_space<smem>>) attributes {dimension_semantics = [#tpu.dimension_semantics<arbitrary>], iteration_bounds = array<i64: 1>, scalar_prefetch = 0 : i64, scratch_operands = 4 : i64, tpu.core_type = #tpu.core_type<tc>, window_params = [{transform_indices = @transform_0, window_bounds = array<i64: 8, 32>}, {}, {transform_indices = @transform_2, window_bounds = array<i64: 8, 32>}, {transform_indices = @transform_3, window_bounds = array<i64: 1, 1>}]} {
    %c0_i32 = arith.constant 0 : i32
    %0 = arith.cmpi eq, %arg0, %c0_i32 : i32
    %1 = arith.extui %0 : i1 to i32
    %cst = arith.constant 1.000000e-24 : f32
    %c0_i32_0 = arith.constant 0 : i32
    %2 = arith.cmpi ne, %1, %c0_i32_0 : i32
    scf.if %2 {
      %cst_33 = arith.constant 0xFF800000 : f32
      %76 = vector.broadcast %cst_33 : f32 to vector<1x8xf32>
      %c0_34 = arith.constant 0 : index
      %c0_35 = arith.constant 0 : index
      %77 = vector.load %arg6[%c0_34, %c0_35] : memref<1x8xf32, #tpu.memory_space<vmem>>, vector<1x8xf32>
      tpu.vector_store %arg6[%c0_34, %c0_35], %76 {strides = array<i32>} : memref<1x8xf32, #tpu.memory_space<vmem>>, vector<1x8xf32>,
      %cst_36 = arith.constant 0.000000e+00 : f32
      %78 = vector.broadcast %cst_36 : f32 to vector<1x8xf32>
      %c0_37 = arith.constant 0 : index
      %c0_38 = arith.constant 0 : index
      %79 = vector.load %arg7[%c0_37, %c0_38] : memref<1x8xf32, #tpu.memory_space<vmem>>, vector<1x8xf32>
      tpu.vector_store %arg7[%c0_37, %c0_38], %78 {strides = array<i32>} : memref<1x8xf32, #tpu.memory_space<vmem>>, vector<1x8xf32>,
      %cst_39 = arith.constant 0.000000e+00 : f32
      %c0_40 = arith.constant 0 : index
      %80 = memref.load %arg8[%c0_40] : memref<2xf32, #tpu.memory_space<smem>>
      memref.store %cst_39, %arg8[%c0_40] : memref<2xf32, #tpu.memory_space<smem>>
      %cst_41 = arith.constant 0.000000e+00 : f32
      %c1_42 = arith.constant 1 : index
      %81 = memref.load %arg8[%c1_42] : memref<2xf32, #tpu.memory_space<smem>>
      memref.store %cst_41, %arg8[%c1_42] : memref<2xf32, #tpu.memory_space<smem>>
      "tpu.region"() ({
        %alloca = memref.alloca() : memref<8x32xf32, #tpu.memory_space<vmem>>
        "tpu.region"() ({
          %93 = tpu.sem_alloc : memref<!tpu.dma_semaphore, #tpu.memory_space<semaphore_mem>>
          %c0_i32_48 = arith.constant 0 : i32
          %c0_i32_49 = arith.constant 0 : i32
          %94 = tpu.memref_slice %arg2[%c0_i32_48, %c0_i32_49] : memref<8x32xf32, #tpu.memory_space<any>> -> memref<8x32xf32, #tpu.memory_space<any>>
          tpu.enqueue_dma source(%94 : memref<8x32xf32, #tpu.memory_space<any>>) target(%alloca : memref<8x32xf32, #tpu.memory_space<vmem>>) target_semaphore(%93 : memref<!tpu.dma_semaphore, #tpu.memory_space<semaphore_mem>>)
          %c0_i32_50 = arith.constant 0 : i32
          %c0_i32_51 = arith.constant 0 : i32
          %95 = tpu.memref_slice %arg2[%c0_i32_50, %c0_i32_51] : memref<8x32xf32, #tpu.memory_space<any>> -> memref<8x32xf32, #tpu.memory_space<any>>
          tpu.wait_dma2 semaphore(%93 : memref<!tpu.dma_semaphore, #tpu.memory_space<semaphore_mem>>) src(%95 : memref<8x32xf32, #tpu.memory_space<any>>) dst(%alloca : memref<8x32xf32, #tpu.memory_space<vmem>>)
          tpu.yield
        }) : () -> ()
        %c0_43 = arith.constant 0 : index
        %c0_44 = arith.constant 0 : index
        %82 = vector.load %alloca[%c0_43, %c0_44] : memref<8x32xf32, #tpu.memory_space<vmem>>, vector<8x32xf32>
        %83 = arith.mulf %82, %82 : vector<8x32xf32>
        %cst_45 = arith.constant dense<0.000000e+00> : vector<8xf32>
        %84 = vector.multi_reduction <add>, %83, %cst_45 [1] : vector<8x32xf32> to vector<8xf32>
        %85 = vector.shape_cast %84 : vector<8xf32> to vector<8x1xf32>
        %86 = vector.broadcast %cst : f32 to vector<8x1xf32>
        %87 = arith.maximumf %85, %86 : vector<8x1xf32>
        %88 = math.rsqrt %87 : vector<8x1xf32>
        %89 = vector.broadcast %88 : vector<8x1xf32> to vector<8x32xf32>
        %90 = arith.mulf %82, %89 : vector<8x32xf32>
        %91 = arith.truncf %90 : vector<8x32xf32> to vector<8x32xbf16>
        %c0_46 = arith.constant 0 : index
        %c0_47 = arith.constant 0 : index
        %92 = vector.load %arg5[%c0_46, %c0_47] : memref<8x32xbf16, #tpu.memory_space<vmem>>, vector<8x32xbf16>
        tpu.vector_store %arg5[%c0_46, %c0_47], %91 {strides = array<i32>} : memref<8x32xbf16, #tpu.memory_space<vmem>>, vector<8x32xbf16>,
        tpu.yield
      }) : () -> ()
    } else {
    }
    %c0 = arith.constant 0 : index
    %c0_1 = arith.constant 0 : index
    %3 = vector.load %arg1[%c0, %c0_1] : memref<8x32xf32, #tpu.memory_space<vmem>>, vector<8x32xf32>
    %4 = arith.mulf %3, %3 : vector<8x32xf32>
    %cst_2 = arith.constant dense<0.000000e+00> : vector<8xf32>
    %5 = vector.multi_reduction <add>, %4, %cst_2 [1] : vector<8x32xf32> to vector<8xf32>
    %6 = vector.shape_cast %5 : vector<8xf32> to vector<8x1xf32>
    %cst_3 = arith.constant 1.000000e-24 : f32
    %7 = vector.broadcast %cst_3 : f32 to vector<8x1xf32>
    %8 = arith.maximumf %6, %7 : vector<8x1xf32>
    %9 = math.rsqrt %8 : vector<8x1xf32>
    %cst_4 = arith.constant 2.000000e+00 : f32
    %10 = vector.broadcast %cst_4 : f32 to vector<8x1xf32>
    %11 = arith.mulf %9, %10 : vector<8x1xf32>
    %12 = vector.broadcast %11 : vector<8x1xf32> to vector<8x32xf32>
    %13 = arith.mulf %3, %12 : vector<8x32xf32>
    %14 = arith.truncf %13 : vector<8x32xf32> to vector<8x32xbf16>
    %c0_5 = arith.constant 0 : index
    %c0_6 = arith.constant 0 : index
    %15 = vector.load %arg3[%c0_5, %c0_6] : memref<8x32xf32, #tpu.memory_space<vmem>>, vector<8x32xf32>
    %16 = arith.mulf %15, %15 : vector<8x32xf32>
    %cst_7 = arith.constant dense<0.000000e+00> : vector<8xf32>
    %17 = vector.multi_reduction <add>, %16, %cst_7 [1] : vector<8x32xf32> to vector<8xf32>
    %18 = vector.shape_cast %17 : vector<8xf32> to vector<8x1xf32>
    %cst_8 = arith.constant 1.000000e-24 : f32
    %19 = vector.broadcast %cst_8 : f32 to vector<8x1xf32>
    %20 = arith.maximumf %18, %19 : vector<8x1xf32>
    %21 = math.rsqrt %20 : vector<8x1xf32>
    %22 = vector.broadcast %21 : vector<8x1xf32> to vector<8x32xf32>
    %23 = arith.mulf %15, %22 : vector<8x32xf32>
    %24 = arith.mulf %13, %23 : vector<8x32xf32>
    %cst_9 = arith.constant dense<0.000000e+00> : vector<8xf32>
    %25 = vector.multi_reduction <add>, %24, %cst_9 [1] : vector<8x32xf32> to vector<8xf32>
    %26 = vector.shape_cast %25 : vector<8xf32> to vector<8x1xf32>
    %c0_10 = arith.constant 0 : index
    %c0_11 = arith.constant 0 : index
    %27 = vector.load %arg5[%c0_10, %c0_11] : memref<8x32xbf16, #tpu.memory_space<vmem>>, vector<8x32xbf16>
    %cst_12 = arith.constant dense<0.000000e+00> : vector<8x8xf32>
    %28 = tpu.matmul %14, %27, %cst_12 {dimension_numbers = #tpu.dot_dimension_numbers<[1], [1], [0], [0], [0, 0, 1, 0], [], []>} : vector<8x32xbf16>, vector<8x32xbf16>, vector<8x8xf32> -> vector<8x8xf32>
    %cst_13 = arith.constant dense<0xFF800000> : vector<8xf32>
    %29 = vector.multi_reduction <maximumf>, %28, %cst_13 [1] : vector<8x8xf32> to vector<8xf32>
    %30 = vector.shape_cast %29 : vector<8xf32> to vector<8x1xf32>
    %31 = vector.broadcast %30 : vector<8x1xf32> to vector<8x8xf32>
    %32 = arith.subf %28, %31 : vector<8x8xf32>
    %33 = math.exp %32 : vector<8x8xf32>
    %cst_14 = arith.constant dense<0.000000e+00> : vector<8xf32>
    %34 = vector.multi_reduction <add>, %33, %cst_14 [1] : vector<8x8xf32> to vector<8xf32>
    %35 = vector.shape_cast %34 : vector<8xf32> to vector<8x1xf32>
    %36 = math.log %35 : vector<8x1xf32>
    %37 = arith.addf %30, %36 : vector<8x1xf32>
    %c0_15 = arith.constant 0 : index
    %38 = memref.load %arg8[%c0_15] : memref<2xf32, #tpu.memory_space<smem>>
    %39 = arith.subf %37, %26 : vector<8x1xf32>
    %40 = vector.shape_cast %39 : vector<8x1xf32> to vector<1x8x1xf32>
    %cst_16 = arith.constant dense<0.000000e+00> : vector<1xf32>
    %41 = vector.multi_reduction <add>, %40, %cst_16 [1, 2] : vector<1x8x1xf32> to vector<1xf32>
    %42 = vector.shape_cast %41 : vector<1xf32> to vector<1x1x1xf32>
    %43 = vector.extract %42[0, 0, 0] : f32 from vector<1x1x1xf32>
    %44 = arith.addf %38, %43 : f32
    %c0_17 = arith.constant 0 : index
    %45 = memref.load %arg8[%c0_17] : memref<2xf32, #tpu.memory_space<smem>>
    memref.store %44, %arg8[%c0_17] : memref<2xf32, #tpu.memory_space<smem>>
    %c1 = arith.constant 1 : index
    %46 = memref.load %arg8[%c1] : memref<2xf32, #tpu.memory_space<smem>>
    %47 = vector.shape_cast %26 : vector<8x1xf32> to vector<1x8x1xf32>
    %cst_18 = arith.constant dense<0.000000e+00> : vector<1xf32>
    %48 = vector.multi_reduction <add>, %47, %cst_18 [1, 2] : vector<1x8x1xf32> to vector<1xf32>
    %49 = vector.shape_cast %48 : vector<1xf32> to vector<1x1x1xf32>
    %50 = vector.extract %49[0, 0, 0] : f32 from vector<1x1x1xf32>
    %51 = arith.addf %46, %50 : f32
    %c1_19 = arith.constant 1 : index
    %52 = memref.load %arg8[%c1_19] : memref<2xf32, #tpu.memory_space<smem>>
    memref.store %51, %arg8[%c1_19] : memref<2xf32, #tpu.memory_space<smem>>
    %c0_20 = arith.constant 0 : index
    %c0_21 = arith.constant 0 : index
    %53 = vector.load %arg6[%c0_20, %c0_21] : memref<1x8xf32, #tpu.memory_space<vmem>>, vector<1x8xf32>
    %cst_22 = arith.constant dense<0xFF800000> : vector<8xf32>
    %54 = vector.multi_reduction <maximumf>, %28, %cst_22 [0] : vector<8x8xf32> to vector<8xf32>
    %55 = vector.shape_cast %54 : vector<8xf32> to vector<1x8xf32>
    %56 = arith.maximumf %53, %55 : vector<1x8xf32>
    %57 = math.exp %30 : vector<8x1xf32>
    %cst_23 = arith.constant 0.000000e+00 : f32
    %58 = vector.broadcast %cst_23 : f32 to vector<1x8xf32>
    %59 = arith.subf %58, %56 : vector<1x8xf32>
    %60 = math.exp %59 : vector<1x8xf32>
    %61 = vector.broadcast %57 : vector<8x1xf32> to vector<8x8xf32>
    %62 = arith.mulf %33, %61 : vector<8x8xf32>
    %cst_24 = arith.constant dense<0.000000e+00> : vector<8xf32>
    %63 = vector.multi_reduction <add>, %62, %cst_24 [0] : vector<8x8xf32> to vector<8xf32>
    %64 = vector.shape_cast %63 : vector<8xf32> to vector<1x8xf32>
    %65 = arith.mulf %60, %64 : vector<1x8xf32>
    %c0_25 = arith.constant 0 : index
    %c0_26 = arith.constant 0 : index
    %66 = vector.load %arg7[%c0_25, %c0_26] : memref<1x8xf32, #tpu.memory_space<vmem>>, vector<1x8xf32>
    %67 = arith.subf %53, %56 : vector<1x8xf32>
    %68 = math.exp %67 : vector<1x8xf32>
    %69 = arith.mulf %66, %68 : vector<1x8xf32>
    %70 = arith.addf %69, %65 : vector<1x8xf32>
    %c0_27 = arith.constant 0 : index
    %c0_28 = arith.constant 0 : index
    %71 = vector.load %arg7[%c0_27, %c0_28] : memref<1x8xf32, #tpu.memory_space<vmem>>, vector<1x8xf32>
    tpu.vector_store %arg7[%c0_27, %c0_28], %70 {strides = array<i32>} : memref<1x8xf32, #tpu.memory_space<vmem>>, vector<1x8xf32>,
    %c0_29 = arith.constant 0 : index
    %c0_30 = arith.constant 0 : index
    %72 = vector.load %arg6[%c0_29, %c0_30] : memref<1x8xf32, #tpu.memory_space<vmem>>, vector<1x8xf32>
    tpu.vector_store %arg6[%c0_29, %c0_30], %56 {strides = array<i32>} : memref<1x8xf32, #tpu.memory_space<vmem>>, vector<1x8xf32>,
    %c0_i32_31 = arith.constant 0 : i32
    %73 = arith.cmpi eq, %arg0, %c0_i32_31 : i32
    %74 = arith.extui %73 : i1 to i32
    %c0_i32_32 = arith.constant 0 : i32
    %75 = arith.cmpi ne, %74, %c0_i32_32 : i32
    scf.if %75 {
      %c0_33 = arith.constant 0 : index
      %c0_34 = arith.constant 0 : index
      %76 = vector.load %arg6[%c0_33, %c0_34] : memref<1x8xf32, #tpu.memory_space<vmem>>, vector<1x8xf32>
      %c0_35 = arith.constant 0 : index
      %c0_36 = arith.constant 0 : index
      %77 = vector.load %arg7[%c0_35, %c0_36] : memref<1x8xf32, #tpu.memory_space<vmem>>, vector<1x8xf32>
      %78 = math.log %77 : vector<1x8xf32>
      %79 = arith.addf %76, %78 : vector<1x8xf32>
      %80 = vector.shape_cast %79 : vector<1x8xf32> to vector<1x1x8xf32>
      %cst_37 = arith.constant dense<0.000000e+00> : vector<1xf32>
      %81 = vector.multi_reduction <add>, %80, %cst_37 [1, 2] : vector<1x1x8xf32> to vector<1xf32>
      %82 = vector.shape_cast %81 : vector<1xf32> to vector<1x1x1xf32>
      %83 = vector.extract %82[0, 0, 0] : f32 from vector<1x1x1xf32>
      %c0_38 = arith.constant 0 : index
      %84 = memref.load %arg8[%c0_38] : memref<2xf32, #tpu.memory_space<smem>>
      %cst_39 = arith.constant 8.000000e+00 : f32
      %85 = arith.divf %84, %cst_39 : f32
      %c1_40 = arith.constant 1 : index
      %86 = memref.load %arg8[%c1_40] : memref<2xf32, #tpu.memory_space<smem>>
      %87 = arith.subf %83, %86 : f32
      %cst_41 = arith.constant 8.000000e+00 : f32
      %88 = arith.divf %87, %cst_41 : f32
      %cst_42 = arith.constant 7.500000e-01 : f32
      %89 = arith.mulf %cst_42, %85 : f32
      %cst_43 = arith.constant 2.500000e-01 : f32
      %90 = arith.mulf %cst_43, %88 : f32
      %91 = arith.addf %89, %90 : f32
      %c0_44 = arith.constant 0 : index
      %c0_45 = arith.constant 0 : index
      %92 = memref.load %arg4[%c0_44, %c0_45] : memref<1x1xf32, #tpu.memory_space<smem>>
      memref.store %91, %arg4[%c0_44, %c0_45] : memref<1x1xf32, #tpu.memory_space<smem>>
    } else {
    }
    return
  }
  func.func @transform_0(%arg0: i32) -> (i32, i32) {
    %c0_i32 = arith.constant 0 : i32
    %c0_i32_0 = arith.constant 0 : i32
    return %arg0, %c0_i32 : i32, i32
  }
  func.func @transform_2(%arg0: i32) -> (i32, i32) {
    %c0_i32 = arith.constant 0 : i32
    %c0_i32_0 = arith.constant 0 : i32
    return %arg0, %c0_i32 : i32, i32
  }
  func.func @transform_3(%arg0: i32) -> (i32, i32) {
    %c0_i32 = arith.constant 0 : i32
    %c0_i32_0 = arith.constant 0 : i32
    %c0_i32_1 = arith.constant 0 : i32
    return %c0_i32, %c0_i32_0 : i32, i32
  }
}

</mosaic_0001>

<llo_original>
// kernel: tpu_custom_call.1
$region0: #{tpu_custom_call.1}
  #allocation0 [shape = 'u32[]', space=smem, size = 0x4, offset = 0x4, fixed_abs, tag = 'smem constant byte address 0x4 - core index']
  #allocation1 [shape = 'u32[144,128]{1,0:T(1,128)}', space=vmem, size = 0x12000, scoped, tag = 'internal scratch']
  #allocation2 [shape = 'bf16[8,32]{1,0:T(8,128)(2,1)}', space=vmem, size = 0x800, scoped, tag = 'scratch operand']
  #allocation3 [shape = 'f32[1,8]{1,0:T(1,128)}', space=vmem, size = 0x200, scoped, tag = 'scratch operand']
  #allocation4 [shape = 'f32[1,8]{1,0:T(1,128)}', space=vmem, size = 0x200, scoped, tag = 'scratch operand']
  #allocation5 [shape = 'f32[2]{0:T(128)}', space=smem, size = 0x200, scoped, tag = 'scratch operand']
  #allocation14 [shape = 's32[]', space=sflag, size = 0x4, offset = 0, fixed_abs, tag = 'sflag constant byte address 0x0 - dummy sync flag']
  #allocation15 [shape = 's32[]', space=sflag, size = 0x4, offset = 0, fixed_abs, tag = 'sflag constant byte address 0x0 - dummy sync flag']
  #allocation16 [shape = 'u32[]', space=smem, size = 0x4, offset = 0x44, fixed_abs, tag = 'smem constant byte address 0x44 - assertion arg 0']
  #allocation17 [shape = 'u32[]', space=smem, size = 0x4, offset = 0x48, fixed_abs, tag = 'smem constant byte address 0x48 - assertion arg 1']
  %s0 = inlined_call_operand.hbm [shape: f32[8,32], index: 0, kind: input, shape index: {}]
  %s1 = inlined_call_operand.hbm [shape: f32[8,32], index: 1, kind: input, shape index: {}]
  %s2 = inlined_call_operand.hbm [shape: f32[8,32], index: 2, kind: input, shape index: {}]
  %s3 = inlined_call_operand.hbm [shape: f32[1,1], index: 3, kind: output, shape index: {}]
  %s4 = sld [smem:[#allocation0]]
  $region40: #{tpu_custom_call.1} parent=0
    _
  %s6 = ssub.s32 1, %s4
  %s7 = scalar_select 0, %s6, %s4
  $region1: #{tpu_custom_call.1} parent=0
    #allocation6 [shape = 'u8[4096]{0}', space=vmem, size = 0x1000, scoped, tag = 'input window, operand 0, single buffered']
    #allocation7 [shape = 's32[1]{0}', space=sflag, size = 0x4, scoped, tag = 'scoped memory for tpu_custom_call.1']
    #allocation8 [shape = 's32[1]{0}', space=sflag, size = 0x4, scoped, tag = 'scoped memory for tpu_custom_call.1']
    #allocation9 [shape = 'u8[4096]{0}', space=vmem, size = 0x1000, scoped, tag = 'input window, operand 2, single buffered']
    #allocation10 [shape = 's32[1]{0}', space=sflag, size = 0x4, scoped, tag = 'scoped memory for tpu_custom_call.1']
    #allocation11 [shape = 'u8[512]{0}', space=smem, size = 0x200, scoped, tag = 'output window, operand 0, single buffered']
    %8 = vsyncpa [#allocation7], 0
    %9 = vsyncpa [#allocation10], 0
    %10 = vsyncpa [#allocation8], 0
    // Predicated region
    $region2: #{tpu_custom_call.1} parent=1 // pred_check
      _
    $region3: #{tpu_custom_call.1} parent=1 // pred_check_branch
      %12 = sbr.rel (0) target = $region5
    $region4: #{tpu_custom_call.1} parent=1 // pred_region
      %s14 = ssub.s32 128, 128
      %15 = vsyncadd [#allocation7], %s14
      %s17 = sshll.u32 [#allocation6], 4
      %s18 = int_to_ptr.vmem [resolvable:$true] %s17
      %20 = dma.hbm_to_vmem [thread:$0]  %s0, 128, %s18, [#allocation7]
    $region5: #{tpu_custom_call.1} parent=1 // pred_fallthru
      _
    // Predicated region
    $region6: #{tpu_custom_call.1} parent=1 // pred_check
      _
    $region7: #{tpu_custom_call.1} parent=1 // pred_check_branch
      %22 = sbr.rel (0) target = $region9
    $region8: #{tpu_custom_call.1} parent=1 // pred_region
      %s24 = ssub.s32 128, 128
      %25 = vsyncadd [#allocation10], %s24
      %s27 = sshll.u32 [#allocation9], 4
      %s28 = int_to_ptr.vmem [resolvable:$true] %s27
      %30 = dma.hbm_to_vmem [thread:$0]  %s2, 128, %s28, [#allocation10]
    $region9: #{tpu_custom_call.1} parent=1 // pred_fallthru
      _
    // Predicated region
    $region10: #{tpu_custom_call.1} parent=1 // pred_check
      _
    $region11: #{tpu_custom_call.1} parent=1 // pred_check_branch
      %32 = sbr.rel (0) target = $region13
    $region12: #{tpu_custom_call.1} parent=1 // pred_region
      %33 = dma.done [#allocation7], 128
    $region13: #{tpu_custom_call.1} parent=1 // pred_fallthru
      _
    // Predicated region
    $region14: #{tpu_custom_call.1} parent=1 // pred_check
      _
    $region15: #{tpu_custom_call.1} parent=1 // pred_check_branch
      %35 = sbr.rel (0) target = $region17
    $region16: #{tpu_custom_call.1} parent=1 // pred_region
      %36 = dma.done [#allocation10], 128
    $region17: #{tpu_custom_call.1} parent=1 // pred_fallthru
      _
    %p38 = scmp.eq.s32.totalorder 0, 0
    // Predicated region
    $region18: #{tpu_custom_call.1} parent=1 // pred_check
      %p39 = pneg %p38
    $region19: #{tpu_custom_call.1} parent=1 // pred_check_branch
      %41 = sbr.rel (%p39) target = $region21
    $region20: #{tpu_custom_call.1} parent=1 // pred_region
      %vm42 = vcmask 57344
      %43 = vst.msk [vmem:[#allocation3] sm:$0x1] %vm42, -inf
      %44 = vst.msk [vmem:[#allocation4] sm:$0x1] %vm42, 0.0
      %s45 = scalar_lea.smem [#allocation5], 0
      %46 = sst [smem:[%s45]] 0.0
      %s47 = scalar_lea.smem [#allocation5], 1
      %48 = sst [smem:[%s47]] 0.0
      $region22: #{tpu_custom_call.1} parent=20
        #allocation12 [shape = 'u8[4096]{0}', space=vmem, size = 0x1000, scoped, tag = 'scoped memory for tpu_custom_call.1']
        $region23: #{tpu_custom_call.1} parent=22
          #allocation13 [shape = 's32[1]{0}', space=sflag, size = 0x4, scoped, tag = 'scoped memory for tpu_custom_call.1']
          // Predicated region
          $region24: #{tpu_custom_call.1} parent=23 // pred_check
            _
          $region25: #{tpu_custom_call.1} parent=23 // pred_check_branch
            %50 = sbr.rel target = $region27
          $region26: #{tpu_custom_call.1} parent=23 // pred_region
            %51 = sst [smem:[#allocation16]] [#allocation15]
            %52 = sst [smem:[#allocation17]] [#allocation14]
          $region27: #{tpu_custom_call.1} parent=23 // pred_fallthru
            _
          %54 = shalt.err (0)
          %s56 = sshll.u32 [#allocation12], 4
          %s57 = int_to_ptr.vmem [resolvable:$true] %s56
          %59 = dma.hbm_to_vmem [thread:$0]  %s1, 128, %s57, [#allocation13]
          %s60 = smul.u32 8, 1
          %s61 = sshll.u32 %s60, 4
          %62 = dma.done [#allocation13], %s61
        %v63 = vld [vmem:[#allocation12] sm:$0xff]
        %v64 = vmul.f32 %v63, %v63
        %vm65 = vcmask 261120
        %v66 = vsel %vm65, %v64, 0.0
        %67 = vadd.xlane.f32.xlu0 %v66
        %v68 = vpop.xlane.xlu0 %67
        %v69 = vmax.f32 %v68, 1e-24
        %v70 = vrsqrt.pop %v69
        %v71 = vmul.f32 %v63, %v70
        %v72 = vpack.c.bf16 %v71, %v71
        %vm73 = vcmask 257024
        %74 = vst.msk [vmem:[#allocation2] sm:$0xf] %vm73, %v72
    $region21: #{tpu_custom_call.1} parent=1 // pred_fallthru
      _
    %v75 = vld [vmem:[#allocation6] sm:$0xff]
    %v76 = vmul.f32 %v75, %v75
    %vm77 = vcmask 261120
    %v78 = vsel %vm77, %v76, 0.0
    %79 = vadd.xlane.f32.xlu0 %v78
    %v80 = vpop.xlane.xlu0 %79
    %v81 = vmax.f32 %v80, 1e-24
    %v82 = vrsqrt.pop %v81
    %v83 = vmul.f32 %v82, 2.0
    %v84 = vmul.f32 %v75, %v83
    %v85 = vpack.c.bf16 %v84, %v84
    %v86 = vld [vmem:[#allocation9] sm:$0xff]
    %v87 = vmul.f32 %v86, %v86
    %v88 = vsel %vm77, %v87, 0.0
    %89 = vadd.xlane.f32.xlu0 %v88
    %v90 = vpop.xlane.xlu0 %89
    %v91 = vmax.f32 %v90, 1e-24
    %v92 = vrsqrt.pop %v91
    %v93 = vmul.f32 %v86, %v92
    %v94 = vmul.f32 %v84, %v93
    %v95 = vsel %vm77, %v94, 0.0
    %96 = vadd.xlane.f32.xlu0 %v95
    %v97 = vpop.xlane.xlu0 %96
    %v98 = vld [vmem:[#allocation2] sm:$0xf]
    %v100 = vsel %vm77, %v85, 0
    %v103 = vsel %vm77, %v98, 0
    %105 = vmatprep.subr.bf16.mxu0 0
    %106 = vmatpush1.bf16.xpose.msra.mxu0 %v103
    %107 = vmatprep.subr.bf16.mxu0 0
    %108 = vmatpush1.bf16.xpose.msra.mxu0 0
    %109 = vmatprep.subr.bf16.mxu0 0
    %110 = vmatpush1.bf16.xpose.msra.mxu0 0
    %111 = vmatprep.subr.bf16.mxu0 0
    %112 = vmatpush1.bf16.xpose.msra.mxu0 0
    %113 = vmatprep.subr.bf16.mxu0 0
    %114 = vmatpush1.bf16.xpose.msra.mxu0 0
    %115 = vmatprep.subr.bf16.mxu0 0
    %116 = vmatpush1.bf16.xpose.msra.mxu0 0
    %117 = vmatprep.subr.bf16.mxu0 0
    %118 = vmatpush1.bf16.xpose.msra.mxu0 0
    %119 = vmatprep.subr.bf16.mxu0 0
    %120 = vmatpush1.bf16.xpose.msra.mxu0 0
    %121 = vmatprep.subr.bf16.mxu0 0
    %122 = vmatpush1.bf16.xpose.msra.mxu0 0
    %123 = vmatprep.subr.bf16.mxu0 0
    %124 = vmatpush1.bf16.xpose.msra.mxu0 0
    %125 = vmatprep.subr.bf16.mxu0 0
    %126 = vmatpush1.bf16.xpose.msra.mxu0 0
    %127 = vmatprep.subr.bf16.mxu0 0
    %128 = vmatpush1.bf16.xpose.msra.mxu0 0
    %129 = vmatprep.subr.bf16.mxu0 0
    %130 = vmatpush1.bf16.xpose.msra.mxu0 0
    %131 = vmatprep.subr.bf16.mxu0 0
    %132 = vmatpush1.bf16.xpose.msra.mxu0 0
    %133 = vmatprep.subr.bf16.mxu0 0
    %134 = vmatpush1.bf16.xpose.msra.mxu0 0
    %135 = vmatprep.subr.bf16.mxu0 0
    %136 = vmatpush1.bf16.xpose.msra.mxu0 0
    %137 = vmatprep.mubr.bf16.mxu0 0
    %138 = vmatmul.mubr.bf16.gmra.mrb[0].mxu0 %v100
    %v139 = vpop.f32.mrb[0].mxu0
    %v140 = vadd.f32 0.0, %v139
    %v141 = vpop.f32.mrb[0].mxu0
    %v142 = vpop.f32.mrb[0].mxu0
    %v143 = vpop.f32.mrb[0].mxu0
    %144 = vdwg.mxu0
    %vm145 = vcmask 64512
    %v146 = vsel %vm145, %v140, -inf
    %147 = vmax.xlane.f32.xlu0 %v146
    %v148 = vpop.xlane.xlu0 %147
    %v149 = vsub.f32 %v140, %v148
    %v150 = vmul.f32 %v149, 1.442695
    %v151 = vpow.pop %v150
    %v152 = vsel %vm145, %v151, 0.0
    %153 = vadd.xlane.f32.xlu0 %v152
    %v154 = vpop.xlane.xlu0 %153
    %v155 = vlog2.pop %v154
    %v156 = vmul.f32 %v155, 0.6931472
    %v157 = vadd.f32 %v148, %v156
    %s158 = sld [smem:[#allocation5]]
    %v159 = vsub.f32 %v157, %v97
    %vm160 = vcmask 7168
    %v161 = vsel %vm160, %v159, 0.0
    %162 = vadd.xlane.f32.xlu0 %v161
    %v163 = vpop.xlane.xlu0 %162
    %v164 = vrot.slane %v163, 4
    %v165 = vadd.f32 %v163, %v164
    %v166 = vrot.slane %v165, 2
    %v167 = vadd.f32 %v165, %v166
    %v168 = vrot.slane %v167, 1
    %v169 = vadd.f32 %v167, %v168
    %s170 = vtos %v169
    %s171 = sadd.f32 %s158, %s170
    %s172 = scalar_lea.smem [#allocation5], 0
    %173 = sst [smem:[%s172]] %s171
    %s174 = sld [smem:[#allocation5 + $0x1]]
    %v175 = vsel %vm160, %v97, 0.0
    %176 = vadd.xlane.f32.xlu0 %v175
    %v177 = vpop.xlane.xlu0 %176
    %v178 = vrot.slane %v177, 4
    %v179 = vadd.f32 %v177, %v178
    %v180 = vrot.slane %v179, 2
    %v181 = vadd.f32 %v179, %v180
    %v182 = vrot.slane %v181, 1
    %v183 = vadd.f32 %v181, %v182
    %s184 = vtos %v183
    %s185 = sadd.f32 %s174, %s184
    %s186 = scalar_lea.smem [#allocation5], 1
    %187 = sst [smem:[%s186]] %s185
    %v188 = vld [vmem:[#allocation3] sm:$0x1]
    %v189 = vrot.slane %v146, 4
    %v190 = vmax.f32 %v146, %v189
    %v191 = vrot.slane %v190, 2
    %v192 = vmax.f32 %v190, %v191
    %v193 = vrot.slane %v192, 1
    %v194 = vmax.f32 %v192, %v193
    %v195 = vmax.f32 %v188, %v194
    %v196 = vmul.f32 %v148, 1.442695
    %v197 = vpow.pop %v196
    %v198 = vsub.f32 0.0, %v195
    %v199 = vmul.f32 %v198, 1.442695
    %v200 = vpow.pop %v199
    %v201 = vmul.f32 %v151, %v197
    %v202 = vsel %vm145, %v201, 0.0
    %v203 = vrot.slane %v202, 4
    %v204 = vadd.f32 %v202, %v203
    %v205 = vrot.slane %v204, 2
    %v206 = vadd.f32 %v204, %v205
    %v207 = vrot.slane %v206, 1
    %v208 = vadd.f32 %v206, %v207
    %v209 = vmul.f32 %v200, %v208
    %v210 = vld [vmem:[#allocation4] sm:$0x1]
    %v211 = vsub.f32 %v188, %v195
    %v212 = vmul.f32 %v211, 1.442695
    %v213 = vpow.pop %v212
    %v214 = vmul.f32 %v210, %v213
    %v215 = vadd.f32 %v214, %v209
    %vm216 = vcmask 57344
    %217 = vst.msk [vmem:[#allocation4] sm:$0x1] %vm216, %v215
    %218 = vst.msk [vmem:[#allocation3] sm:$0x1] %vm216, %v195
    // Predicated region
    $region28: #{tpu_custom_call.1} parent=1 // pred_check
      %p219 = pneg %p38
    $region29: #{tpu_custom_call.1} parent=1 // pred_check_branch
      %221 = sbr.rel (%p219) target = $region31
    $region30: #{tpu_custom_call.1} parent=1 // pred_region
      %v222 = vld [vmem:[#allocation3] sm:$0x1]
      %v223 = vld [vmem:[#allocation4] sm:$0x1]
      %v224 = vlog2.pop %v223
      %v225 = vmul.f32 %v224, 0.6931472
      %v226 = vadd.f32 %v222, %v225
      %v227 = vsel %vm216, %v226, 0.0
      %228 = vadd.xlane.f32.xlu0 %v227
      %v229 = vpop.xlane.xlu0 %228
      %v230 = vrot.slane %v229, 4
      %v231 = vadd.f32 %v229, %v230
      %v232 = vrot.slane %v231, 2
      %v233 = vadd.f32 %v231, %v232
      %v234 = vrot.slane %v233, 1
      %v235 = vadd.f32 %v233, %v234
      %s236 = vtos %v235
      %s237 = sld [smem:[#allocation5]]
      %v238 = vrcp.pop 8.0
      %s239 = vtos %v238
      %s240 = smul.f32 %s237, %s239
      %s241 = sld [smem:[#allocation5 + $0x1]]
      %s242 = ssub.f32 %s236, %s241
      %v243 = vrcp.pop 8.0
      %s244 = vtos %v243
      %s245 = smul.f32 %s242, %s244
      %s246 = smul.f32 %s240, 0.75
      %s247 = smul.f32 %s245, 0.25
      %s248 = sadd.f32 %s246, %s247
      %s249 = scalar_lea.smem [#allocation11], 0
      %250 = sst [smem:[%s249]] %s248
    $region31: #{tpu_custom_call.1} parent=1 // pred_fallthru
      _
    // Predicated region
    $region32: #{tpu_custom_call.1} parent=1 // pred_check
      _
    $region33: #{tpu_custom_call.1} parent=1 // pred_check_branch
      %252 = sbr.rel (0) target = $region35
    $region34: #{tpu_custom_call.1} parent=1 // pred_region
      %s254 = ssub.s32 16, 16
      %255 = vsyncadd [#allocation8], %s254
      %258 = dma.smem_to_hbm [#allocation11], 16, %s3, [#allocation8]
    $region35: #{tpu_custom_call.1} parent=1 // pred_fallthru
      _
    // Predicated region
    $region36: #{tpu_custom_call.1} parent=1 // pred_check
      _
    $region37: #{tpu_custom_call.1} parent=1 // pred_check_branch
      %260 = sbr.rel (0) target = $region39
    $region38: #{tpu_custom_call.1} parent=1 // pred_region
      %261 = dma.done [#allocation8], 16
    $region39: #{tpu_custom_call.1} parent=1 // pred_fallthru
      _
    %262 = sfence
    %263 = vsyncpa [#allocation7], 1
    %264 = vsyncpa [#allocation10], 1
    %265 = vsyncpa [#allocation8], 1

</llo_original>
